<compile_context>
chip_gen: v7x
topology: tpu7x:2x2x1
jax: 0.10.0
libtpu: 0.0.40
codegen_flags: <defaults>
</compile_context>

<pallas_src>
import functools

import jax
import jax.numpy as jnp
from jax.experimental import pallas as pl
from jax.experimental.pallas import tpu as pltpu


# ----------------------------------------------------------------------------
# Helpers
# ----------------------------------------------------------------------------
def _vmem_budget_bytes():
    """~80% of physical VMEM for this generation (conservative 64 MiB fallback)."""
    cap = 64 << 20
    try:
        info = pltpu.get_tpu_info()
        cap = int(getattr(info, "vmem_capacity_bytes", cap))
    except Exception:
        pass
    return int(cap * 0.8)


def _pick_chunk(c):
    """Lane-chunk so a live f32 chunk is ~96 KiB (~24 vregs), multiple of 128."""
    chunk = ((96 * 1024 // 4) // max(c, 1)) // 128 * 128
    return int(max(128, min(1024, chunk)))


def _pack_weights(params, C, Cr):
    """Pack all centre-tap conv params into one (C, 4Cr+4) slab + one (1, 2Cr+1) row."""
    f32 = jnp.float32
    w1aT = params["w1a"][:, :, 1].T                      # (C, Cr)
    w2a = params["w2a"][:, :, 1]                         # (C, Cr)
    w1mT = params["w1m"][:, :, 1].T                      # (C, Cr)
    w2m = params["w2m"][:, :, 1]                         # (C, Cr)
    b2a = params["b2a"].reshape(C, 1)
    b2m = params["b2m"].reshape(C, 1)
    wsp_c = params["wsp"][0, :, 1]                       # (2C,)
    wspm = wsp_c[:C].reshape(C, 1)                       # multiplies max
    wspa = wsp_c[C:].reshape(C, 1)                       # multiplies mean
    wc = jnp.concatenate([w1aT, w2a, w1mT, w2m, b2a, b2m, wspm, wspa],
                         axis=1).astype(f32)             # (C, 4*Cr+4)
    wr = jnp.concatenate([params["b1a"], params["b1m"], params["bsp"]]
                         ).reshape(1, 2 * Cr + 1).astype(f32)
    return wc, wr


# ----------------------------------------------------------------------------
# Resident path: one batch element per grid step, x block resident in VMEM.
# ----------------------------------------------------------------------------
def _cbam_resident_kernel(x_ref, wc_ref, wr_ref, o_ref, *, cr, chunk, n):
    f32 = jnp.float32
    C = x_ref.shape[1]
    n_full = n // chunk                 # static
    rem = n - n_full * chunk            # static ragged tail (may be 0)
    unroll = max(1, min(n_full, 8))     # integer partial unroll

    # --- pass 1: single sweep over x -> per-channel max / sum ---------------
    def red_chunk(start, size, mx, sm):
        xc = x_ref[0, :, pl.ds(start, size)].astype(f32)         # (C, size)
        mx = jnp.maximum(mx, jnp.max(xc, axis=-1, keepdims=True))
        sm = sm + jnp.sum(xc, axis=-1, keepdims=True)
        return mx, sm

    mx = jnp.full((C, 1), -jnp.inf, f32)
    sm = jnp.zeros((C, 1), f32)
    if n_full > 0:
        def body(i, carry):
            start = pl.multiple_of(i * chunk, 128)
            return red_chunk(start, chunk, *carry)
        mx, sm = jax.lax.fori_loop(0, n_full, body, (mx, sm), unroll=unroll)
    if rem > 0:                         # peeled tail: only chunk that can be ragged
        mx, sm = red_chunk(n_full * chunk, rem, mx, sm)
    avg = sm * (1.0 / n)                                         # (C, 1)

    # --- unpack packed centre-tap weight slabs -------------------------------
    wc = wc_ref[...]                                             # (C, 4*Cr+4)
    wr = wr_ref[...]                                             # (1, 2*Cr+1)
    w1aT = wc[:, 0 * cr:1 * cr]
    w2a = wc[:, 1 * cr:2 * cr]
    w1mT = wc[:, 2 * cr:3 * cr]
    w2m = wc[:, 3 * cr:4 * cr]
    b2a = wc[:, 4 * cr + 0:4 * cr + 1]
    b2m = wc[:, 4 * cr + 1:4 * cr + 2]
    wspm = wc[:, 4 * cr + 2:4 * cr + 3]
    wspa = wc[:, 4 * cr + 3:4 * cr + 4]
    b1a = wr[:, 0 * cr:1 * cr]
    b1m = wr[:, 1 * cr:2 * cr]
    bsp = wr[:, 2 * cr:2 * cr + 1]

    # --- tiny channel MLPs: VPU/XLU (shapes far below MXU tile) --------------
    def mlp(vec_col, w1T, b1_row, w2, b2_col):
        h = jnp.maximum(jnp.sum(w1T * vec_col, axis=0, keepdims=True) + b1_row, 0.0)
        return jnp.sum(w2 * h, axis=1, keepdims=True) + b2_col

    channel = jax.nn.sigmoid(mlp(avg, w1aT, b1a, w2a, b2a)
                             + mlp(mx, w1mT, b1m, w2m, b2m))     # (C,1), > 0

    # --- spatial attention via identity: max/mean of channel*x ---------------
    s = jnp.sum(wspm * (channel * mx) + wspa * (channel * avg),
                keepdims=True) + bsp                             # (1, 1)
    spatial = jax.nn.sigmoid(s)
    scale = spatial * channel                                    # (C, 1), f32

    # --- pass 2: fused scale in f32, single cast on store --------------------
    def apply_chunk(start, size):
        xc = x_ref[0, :, pl.ds(start, size)].astype(f32)
        o_ref[0, :, pl.ds(start, size)] = (xc * scale).astype(o_ref.dtype)

    if n_full > 0:
        def body2(i, carry):
            start = pl.multiple_of(i * chunk, 128)
            apply_chunk(start, chunk)
            return carry
        jax.lax.fori_loop(0, n_full, body2, 0, unroll=unroll)
    if rem > 0:
        apply_chunk(n_full * chunk, rem)


# ----------------------------------------------------------------------------
# Split (large-tile fallback) path: reduce kernel + tiny JAX math + apply kernel
# ----------------------------------------------------------------------------
def _cbam_reduce_kernel(x_ref, mx_ref, sm_ref, *, n, tn):
    f32 = jnp.float32
    j = pl.program_id(1)

    @pl.when(j == 0)
    def _():
        mx_ref[...] = jnp.full(mx_ref.shape, -jnp.inf, mx_ref.dtype)
        sm_ref[...] = jnp.zeros(sm_ref.shape, sm_ref.dtype)

    xc = x_ref[0].astype(f32)                                    # (C, tn)
    if n % tn != 0:            # static: only then can a tile hold invalid lanes
        col = j * tn + jax.lax.broadcasted_iota(jnp.int32, xc.shape, 1)
        valid = col < n
        xmax = jnp.where(valid, xc, -jnp.inf)
        xsum = jnp.where(valid, xc, 0.0)
    else:
        xmax, xsum = xc, xc
    mx_ref[0] = jnp.maximum(mx_ref[0], jnp.max(xmax, axis=-1, keepdims=True))
    sm_ref[0] = sm_ref[0] + jnp.sum(xsum, axis=-1, keepdims=True)


def _cbam_apply_kernel(x_ref, sc_ref, o_ref):
    f32 = jnp.float32
    xc = x_ref[0].astype(f32)                                    # (C, tn)
    sc = sc_ref[0].astype(f32)                                   # (C, 1)
    o_ref[0] = (xc * sc).astype(o_ref.dtype)


def _fused_scale_host(mx, avg, params):
    """Per-batch fused scale (spatial*channel) from per-channel max/mean. Tiny."""
    f32 = jnp.float32

    def lin(v, w, b):                      # centre-tap conv on a length-1 signal
        return v @ w[:, :, 1].T.astype(f32) + b.astype(f32)

    def mlp(v, w1, b1, w2, b2):
        return lin(jax.nn.relu(lin(v, w1, b1)), w2, b2)

    channel = jax.nn.sigmoid(
        mlp(avg, params["w1a"], params["b1a"], params["w2a"], params["b2a"])
        + mlp(mx, params["w1m"], params["b1m"], params["w2m"], params["b2m"]))  # (B,C)
    wsp = params["wsp"][0, :, 1].astype(f32)                     # (2C,)
    s = jnp.concatenate([channel * mx, channel * avg], axis=1) @ wsp \
        + params["bsp"].astype(f32)                              # (B,)
    return jax.nn.sigmoid(s)[:, None] * channel                  # (B, C)


def _cbam3d_split(x, params, budget, split_tile):
    B, C, N = x.shape
    f32 = jnp.float32
    itemsize = x.dtype.itemsize
    if split_tile is None:
        tn = ((4 << 20) // (max(C, 1) * itemsize)) // 128 * 128  # ~4 MiB x-tile
        tn = int(max(128, min(tn, -(-N // 128) * 128)))
    else:
        tn = int(split_tile)
    nt = -(-N // tn)

    sub = max(8, 32 // itemsize)
    c_pad = -(-C // sub) * sub
    blk = c_pad * tn * itemsize
    vmem_limit = int(min(budget, max(6 * blk + (2 << 20), 16 << 20)))

    mx, sm = pl.pallas_call(
        functools.partial(_cbam_reduce_kernel, n=N, tn=tn),
        out_shape=(jax.ShapeDtypeStruct((B, C, 1), f32),
                   jax.ShapeDtypeStruct((B, C, 1), f32)),
        grid=(B, nt),
        in_specs=[pl.BlockSpec((1, C, tn), lambda b, j: (b, 0, j))],
        out_specs=(pl.BlockSpec((1, C, 1), lambda b, j: (b, 0, 0)),
                   pl.BlockSpec((1, C, 1), lambda b, j: (b, 0, 0))),
        compiler_params=pltpu.CompilerParams(
            dimension_semantics=("parallel", "arbitrary"),
            vmem_limit_bytes=vmem_limit),
    )(x)

    scale = _fused_scale_host(mx[:, :, 0], sm[:, :, 0] / N, params)  # (B, C)
    scale = scale[:, :, None].astype(f32)                            # (B, C, 1)

    out = pl.pallas_call(
        _cbam_apply_kernel,
        out_shape=jax.ShapeDtypeStruct((B, C, N), x.dtype),
        grid=(B, nt),
        in_specs=[pl.BlockSpec((1, C, tn), lambda b, j: (b, 0, j)),
                  pl.BlockSpec((1, C, 1), lambda b, j: (b, 0, 0))],
        out_specs=pl.BlockSpec((1, C, tn), lambda b, j: (b, 0, j)),
        compiler_params=pltpu.CompilerParams(
            dimension_semantics=("parallel", "parallel"),
            vmem_limit_bytes=vmem_limit),
    )(x, scale)
    return out


# ----------------------------------------------------------------------------
# Public wrapper
# ----------------------------------------------------------------------------
def cbam3d_pallas(x, params, *, force_split=False, split_tile=None):
    B, C, N = x.shape
    assert N > 0, "CBAM over an empty point dimension is undefined"
    Cr = params["w1a"].shape[0]
    itemsize = x.dtype.itemsize

    budget = _vmem_budget_bytes()
    # Padded-to-tile VMEM footprint of one (1, C, N) block.
    sub = max(8, 32 // itemsize)
    c_pad = -(-C // sub) * sub
    n_pad = -(-N // 128) * 128
    blk_bytes = c_pad * n_pad * itemsize
    resident_need = 4 * blk_bytes + (4 << 20)   # in x2 + out x2 + headroom

    if force_split or resident_need > budget:
        # TODO(synk): the split path still leaves one v7x TensorCore idle for B==1
        # in the reduce kernel; a per-core N-split via core_map would fix that.
        return _cbam3d_split(x, params, budget, split_tile)

    wc, wr = _pack_weights(params, C, Cr)
    chunk = _pick_chunk(C)
    vmem_limit = int(min(budget, max(resident_need, 16 << 20)))

    kern = functools.partial(_cbam_resident_kernel, cr=Cr, chunk=chunk, n=N)
    return pl.pallas_call(
        kern,
        out_shape=jax.ShapeDtypeStruct((B, C, N), x.dtype),
        grid=(B,),
        in_specs=[
            pl.BlockSpec((1, C, N), lambda b: (b, 0, 0)),
            pl.BlockSpec(wc.shape, lambda b: (0, 0)),
            pl.BlockSpec(wr.shape, lambda b: (0, 0)),
        ],
        out_specs=pl.BlockSpec((1, C, N), lambda b: (b, 0, 0)),
        compiler_params=pltpu.CompilerParams(
            dimension_semantics=("parallel",),
            vmem_limit_bytes=vmem_limit),
    )(x, wc, wr)


# ----------------------------------------------------------------------------
# Pure-JAX reference reproducing the exact PyTorch forward (full 3-tap convs)
# ----------------------------------------------------------------------------
def cbam3d_reference(x, params):
    def conv1_len1(v, W, b):
        # v: (B, Cin, 1); Conv1d(k=3, stride=1, pad=1) -> (B, Cout, 1)
        vpad = jnp.pad(v, ((0, 0), (0, 0), (1, 1)))
        out = jnp.einsum("ock,bck->bo", W, vpad) + b
        return out[:, :, None]

    avg = jnp.mean(x, axis=2, keepdims=True)
    mx = jnp.max(x, axis=2, keepdims=True)
    a = conv1_len1(jax.nn.relu(conv1_len1(avg, params["w1a"], params["b1a"])),
                   params["w2a"], params["b2a"])
    m = conv1_len1(jax.nn.relu(conv1_len1(mx, params["w1m"], params["b1m"])),
                   params["w2m"], params["b2m"])
    channel = jax.nn.sigmoid(a + m)
    x2 = channel * x
    mx2 = jnp.max(x2, axis=2, keepdims=True)
    avg2 = jnp.mean(x2, axis=2, keepdims=True)
    spatial = jax.nn.sigmoid(
        conv1_len1(jnp.concatenate([mx2, avg2], axis=1), params["wsp"], params["bsp"]))
    return spatial * x2


# ----------------------------------------------------------------------------
if __name__ == "__main__":
    B, C = 2, 32
    reduction = 16
    Cr = C // reduction

    key = jax.random.PRNGKey(0)
    ks = jax.random.split(key, 16)
    nrm = lambda k, shp: 0.1 * jax.random.normal(k, shp, jnp.float32)

    params = {
        "w1a": nrm(ks[0], (Cr, C, 3)), "b1a": nrm(ks[1], (Cr,)),
        "w2a": nrm(ks[2], (C, Cr, 3)), "b2a": nrm(ks[3], (C,)),
        "w1m": nrm(ks[4], (Cr, C, 3)), "b1m": nrm(ks[5], (Cr,)),
        "w2m": nrm(ks[6], (C, Cr, 3)), "b2m": nrm(ks[7], (C,)),
        "wsp": nrm(ks[8], (1, 2 * C, 3)), "bsp": nrm(ks[9], (1,)),
    }

    def check(x, name, **kw):
        out = jax.block_until_ready(cbam3d_pallas(x, params, **kw))
        ref = cbam3d_reference(x, params)
        if not jnp.allclose(out, ref, rtol=1e-4, atol=1e-4):
            err = float(jnp.max(jnp.abs(out - ref)))
            raise AssertionError(f"Pallas kernel mismatch [{name}]: max abs err {err}")

    # Resident path: lane-dense, ragged (N%128!=0), and chunked-loop + peeled tail.
    check(jax.random.normal(ks[10], (B, C, 128), jnp.float32), "resident N=128")
    check(jax.random.normal(ks[11], (B, C, 100), jnp.float32), "resident N=100 ragged")
    check(jax.random.normal(ks[12], (B, C, 900), jnp.float32), "resident N=900 loop+tail")

    # Split fallback path: even tiles and a ragged (masked) last tile.
    check(jax.random.normal(ks[13], (B, C, 384), jnp.float32), "split even tiles",
          force_split=True, split_tile=128)
    check(jax.random.normal(ks[14], (B, C, 100), jnp.float32), "split ragged tile",
          force_split=True, split_tile=128)

    print("KERNEL_OK")
</pallas_src>

<mosaic_0001>
module attributes {stable_mosaic.version = 11 : i64} {
  func.func @_cbam_resident_kernel(%arg0: i32, %arg1: memref<1x32x128xf32, #tpu.memory_space<vmem>>, %arg2: memref<32x12xf32, #tpu.memory_space<vmem>>, %arg3: memref<1x5xf32, #tpu.memory_space<vmem>>, %arg4: memref<1x32x128xf32, #tpu.memory_space<vmem>>) attributes {dimension_semantics = [#tpu.dimension_semantics<parallel>], iteration_bounds = array<i64: 2>, scalar_prefetch = 0 : i64, scratch_operands = 0 : i64, tpu.core_type = #tpu.core_type<tc>, window_params = [{transform_indices = @transform_0, window_bounds = array<i64: 1, 32, 128>}, {pipeline_mode = #tpu.pipeline_mode<synchronous>, transform_indices = @transform_1, window_bounds = array<i64: 32, 12>}, {pipeline_mode = #tpu.pipeline_mode<synchronous>, transform_indices = @transform_2, window_bounds = array<i64: 1, 5>}, {transform_indices = @transform_3, window_bounds = array<i64: 1, 32, 128>}]} {
    %cst = arith.constant 0xFF800000 : f32
    %0 = vector.broadcast %cst : f32 to vector<32x1xf32>
    %cst_0 = arith.constant 0.000000e+00 : f32
    %1 = vector.broadcast %cst_0 : f32 to vector<32x1xf32>
    %c0 = arith.constant 0 : index
    %c0_1 = arith.constant 0 : index
    %c0_2 = arith.constant 0 : index
    %2 = vector.load %arg1[%c0, %c0_1, %c0_2] : memref<1x32x128xf32, #tpu.memory_space<vmem>>, vector<1x32x128xf32>
    %3 = vector.shape_cast %2 : vector<1x32x128xf32> to vector<32x128xf32>
    %cst_3 = arith.constant dense<0xFF800000> : vector<32xf32>
    %4 = vector.multi_reduction <maximumf>, %3, %cst_3 [1] : vector<32x128xf32> to vector<32xf32>
    %5 = vector.shape_cast %4 : vector<32xf32> to vector<32x1xf32>
    %6 = arith.maximumf %0, %5 : vector<32x1xf32>
    %cst_4 = arith.constant dense<0.000000e+00> : vector<32xf32>
    %7 = vector.multi_reduction <add>, %3, %cst_4 [1] : vector<32x128xf32> to vector<32xf32>
    %8 = vector.shape_cast %7 : vector<32xf32> to vector<32x1xf32>
    %9 = arith.addf %1, %8 : vector<32x1xf32>
    %cst_5 = arith.constant 7.812500e-03 : f32
    %10 = vector.broadcast %cst_5 : f32 to vector<32x1xf32>
    %11 = arith.mulf %9, %10 : vector<32x1xf32>
    %c0_6 = arith.constant 0 : index
    %c0_7 = arith.constant 0 : index
    %12 = vector.load %arg2[%c0_6, %c0_7] : memref<32x12xf32, #tpu.memory_space<vmem>>, vector<32x12xf32>
    %c0_8 = arith.constant 0 : index
    %c0_9 = arith.constant 0 : index
    %13 = vector.load %arg3[%c0_8, %c0_9] : memref<1x5xf32, #tpu.memory_space<vmem>>, vector<1x5xf32>
    %14 = vector.extract_strided_slice %12 {offsets = [0, 0], sizes = [32, 2], strides = [1, 1]} : vector<32x12xf32> to vector<32x2xf32>
    %15 = vector.extract_strided_slice %12 {offsets = [0, 2], sizes = [32, 2], strides = [1, 1]} : vector<32x12xf32> to vector<32x2xf32>
    %16 = vector.extract_strided_slice %12 {offsets = [0, 4], sizes = [32, 2], strides = [1, 1]} : vector<32x12xf32> to vector<32x2xf32>
    %17 = vector.extract_strided_slice %12 {offsets = [0, 6], sizes = [32, 2], strides = [1, 1]} : vector<32x12xf32> to vector<32x2xf32>
    %18 = vector.extract_strided_slice %12 {offsets = [0, 8], sizes = [32, 1], strides = [1, 1]} : vector<32x12xf32> to vector<32x1xf32>
    %19 = vector.extract_strided_slice %12 {offsets = [0, 9], sizes = [32, 1], strides = [1, 1]} : vector<32x12xf32> to vector<32x1xf32>
    %20 = vector.extract_strided_slice %12 {offsets = [0, 10], sizes = [32, 1], strides = [1, 1]} : vector<32x12xf32> to vector<32x1xf32>
    %21 = vector.extract_strided_slice %12 {offsets = [0, 11], sizes = [32, 1], strides = [1, 1]} : vector<32x12xf32> to vector<32x1xf32>
    %22 = vector.extract_strided_slice %13 {offsets = [0, 0], sizes = [1, 2], strides = [1, 1]} : vector<1x5xf32> to vector<1x2xf32>
    %23 = vector.extract_strided_slice %13 {offsets = [0, 2], sizes = [1, 2], strides = [1, 1]} : vector<1x5xf32> to vector<1x2xf32>
    %24 = vector.extract_strided_slice %13 {offsets = [0, 4], sizes = [1, 1], strides = [1, 1]} : vector<1x5xf32> to vector<1x1xf32>
    %25 = vector.broadcast %11 : vector<32x1xf32> to vector<32x2xf32>
    %26 = arith.mulf %14, %25 : vector<32x2xf32>
    %cst_10 = arith.constant dense<0.000000e+00> : vector<2xf32>
    %27 = vector.multi_reduction <add>, %26, %cst_10 [0] : vector<32x2xf32> to vector<2xf32>
    %28 = vector.shape_cast %27 : vector<2xf32> to vector<1x2xf32>
    %29 = arith.addf %28, %22 : vector<1x2xf32>
    %cst_11 = arith.constant 0.000000e+00 : f32
    %30 = vector.broadcast %cst_11 : f32 to vector<1x2xf32>
    %31 = arith.maximumf %29, %30 : vector<1x2xf32>
    %32 = vector.broadcast %31 : vector<1x2xf32> to vector<32x2xf32>
    %33 = arith.mulf %15, %32 : vector<32x2xf32>
    %cst_12 = arith.constant dense<0.000000e+00> : vector<32xf32>
    %34 = vector.multi_reduction <add>, %33, %cst_12 [1] : vector<32x2xf32> to vector<32xf32>
    %35 = vector.shape_cast %34 : vector<32xf32> to vector<32x1xf32>
    %36 = arith.addf %35, %18 : vector<32x1xf32>
    %37 = vector.broadcast %6 : vector<32x1xf32> to vector<32x2xf32>
    %38 = arith.mulf %16, %37 : vector<32x2xf32>
    %cst_13 = arith.constant dense<0.000000e+00> : vector<2xf32>
    %39 = vector.multi_reduction <add>, %38, %cst_13 [0] : vector<32x2xf32> to vector<2xf32>
    %40 = vector.shape_cast %39 : vector<2xf32> to vector<1x2xf32>
    %41 = arith.addf %40, %23 : vector<1x2xf32>
    %cst_14 = arith.constant 0.000000e+00 : f32
    %42 = vector.broadcast %cst_14 : f32 to vector<1x2xf32>
    %43 = arith.maximumf %41, %42 : vector<1x2xf32>
    %44 = vector.broadcast %43 : vector<1x2xf32> to vector<32x2xf32>
    %45 = arith.mulf %17, %44 : vector<32x2xf32>
    %cst_15 = arith.constant dense<0.000000e+00> : vector<32xf32>
    %46 = vector.multi_reduction <add>, %45, %cst_15 [1] : vector<32x2xf32> to vector<32xf32>
    %47 = vector.shape_cast %46 : vector<32xf32> to vector<32x1xf32>
    %48 = arith.addf %47, %19 : vector<32x1xf32>
    %49 = arith.addf %36, %48 : vector<32x1xf32>
    %50 = arith.negf %49 : vector<32x1xf32>
    %51 = math.exp %50 : vector<32x1xf32>
    %cst_16 = arith.constant 1.000000e+00 : f32
    %52 = vector.broadcast %cst_16 : f32 to vector<32x1xf32>
    %53 = arith.addf %52, %51 : vector<32x1xf32>
    %54 = arith.divf %52, %53 : vector<32x1xf32>
    %55 = arith.mulf %54, %6 : vector<32x1xf32>
    %56 = arith.mulf %20, %55 : vector<32x1xf32>
    %57 = arith.mulf %54, %11 : vector<32x1xf32>
    %58 = arith.mulf %21, %57 : vector<32x1xf32>
    %59 = arith.addf %56, %58 : vector<32x1xf32>
    %60 = vector.shape_cast %59 : vector<32x1xf32> to vector<1x32x1xf32>
    %cst_17 = arith.constant dense<0.000000e+00> : vector<1xf32>
    %61 = vector.multi_reduction <add>, %60, %cst_17 [1, 2] : vector<1x32x1xf32> to vector<1xf32>
    %62 = vector.shape_cast %61 : vector<1xf32> to vector<1x1x1xf32>
    %63 = vector.extract %62[0, 0, 0] : f32 from vector<1x1x1xf32>
    %64 = vector.broadcast %63 : f32 to vector<1x1xf32>
    %65 = arith.addf %64, %24 : vector<1x1xf32>
    %66 = arith.negf %65 : vector<1x1xf32>
    %67 = math.exp %66 : vector<1x1xf32>
    %cst_18 = arith.constant 1.000000e+00 : f32
    %68 = vector.broadcast %cst_18 : f32 to vector<1x1xf32>
    %69 = arith.addf %68, %67 : vector<1x1xf32>
    %70 = arith.divf %68, %69 : vector<1x1xf32>
    %71 = vector.broadcast %70 : vector<1x1xf32> to vector<32x1xf32>
    %72 = arith.mulf %71, %54 : vector<32x1xf32>
    %c0_19 = arith.constant 0 : index
    %c0_20 = arith.constant 0 : index
    %c0_21 = arith.constant 0 : index
    %73 = vector.load %arg1[%c0_19, %c0_20, %c0_21] : memref<1x32x128xf32, #tpu.memory_space<vmem>>, vector<1x32x128xf32>
    %74 = vector.shape_cast %73 : vector<1x32x128xf32> to vector<32x128xf32>
    %75 = vector.broadcast %72 : vector<32x1xf32> to vector<32x128xf32>
    %76 = arith.mulf %74, %75 : vector<32x128xf32>
    %c0_22 = arith.constant 0 : index
    %c0_23 = arith.constant 0 : index
    %c0_24 = arith.constant 0 : index
    %77 = vector.load %arg4[%c0_22, %c0_23, %c0_24] : memref<1x32x128xf32, #tpu.memory_space<vmem>>, vector<1x32x128xf32>
    %78 = vector.shape_cast %77 : vector<1x32x128xf32> to vector<32x128xf32>
    %79 = vector.shape_cast %76 : vector<32x128xf32> to vector<1x32x128xf32>
    tpu.vector_store %arg4[%c0_22, %c0_23, %c0_24], %79 {strides = array<i32>} : memref<1x32x128xf32, #tpu.memory_space<vmem>>, vector<1x32x128xf32>,
    return
  }
  func.func @transform_0(%arg0: i32) -> (i32, i32, i32) {
    %c0_i32 = arith.constant 0 : i32
    %c0_i32_0 = arith.constant 0 : i32
    %c0_i32_1 = arith.constant 0 : i32
    return %arg0, %c0_i32, %c0_i32_0 : i32, i32, i32
  }
  func.func @transform_1(%arg0: i32) -> (i32, i32) {
    %c0_i32 = arith.constant 0 : i32
    %c0_i32_0 = arith.constant 0 : i32
    %c0_i32_1 = arith.constant 0 : i32
    return %c0_i32, %c0_i32_0 : i32, i32
  }
  func.func @transform_2(%arg0: i32) -> (i32, i32) {
    %c0_i32 = arith.constant 0 : i32
    %c0_i32_0 = arith.constant 0 : i32
    %c0_i32_1 = arith.constant 0 : i32
    return %c0_i32, %c0_i32_0 : i32, i32
  }
  func.func @transform_3(%arg0: i32) -> (i32, i32, i32) {
    %c0_i32 = arith.constant 0 : i32
    %c0_i32_0 = arith.constant 0 : i32
    %c0_i32_1 = arith.constant 0 : i32
    return %arg0, %c0_i32, %c0_i32_0 : i32, i32, i32
  }
}

</mosaic_0001>

<llo_original>
// kernel: tpu_custom_call.1
$region0: #{tpu_custom_call.1}
  #allocation0 [shape = 'u32[]', space=smem, size = 0x4, offset = 0x4, fixed_abs, tag = 'smem constant byte address 0x4 - core index']
  #allocation1 [shape = 'u32[144,128]{1,0:T(1,128)}', space=vmem, size = 0x12000, scoped, tag = 'internal scratch']
  %s0 = inlined_call_operand.hbm [shape: f32[2,32,128], index: 0, kind: input, shape index: {}]
  %s1 = inlined_call_operand.vmem [shape: f32[32,12], index: 1, kind: input, shape index: {}]
  %s2 = inlined_call_operand.vmem [shape: f32[1,5], index: 2, kind: input, shape index: {}]
  %s3 = inlined_call_operand.hbm [shape: f32[2,32,128], index: 3, kind: output, shape index: {}]
  %s4 = sld [smem:[#allocation0]]
  $region49: #{tpu_custom_call.1} parent=0
    _
  %s6 = ssub.s32 1, %s4
  %s7 = scalar_select 0, %s6, %s4
  $region1: #{tpu_custom_call.1} parent=0
    #allocation2 [shape = 'u8[32768]{0}', space=vmem, size = 0x8000, scoped, tag = 'input window, operand 0']
    #allocation3 [shape = 's32[2]{0}', space=sflag, size = 0x8, scoped, tag = 'scoped memory for tpu_custom_call.1']
    #allocation4 [shape = 's32[2]{0}', space=sflag, size = 0x8, scoped, tag = 'scoped memory for tpu_custom_call.1']
    #allocation5 [shape = 'u8[32768]{0}', space=vmem, size = 0x8000, scoped, tag = 'output window, operand 0']
    %8 = vsyncpa [#allocation3], 0
    %s9 = scalar_lea.sflag [#allocation3], 1
    %10 = vsyncpa %s9, 0
    %11 = vsyncpa [#allocation4], 0
    %s12 = scalar_lea.sflag [#allocation4], 1
    %13 = vsyncpa %s12, 0
    loop: start=0, step=1, limit=4
    $region2: #{tpu_custom_call.1} parent=1 // loop_pre_header
      _
    $region3: #{tpu_custom_call.1} parent=1 // loop_header
      %s15 = sphi 0, %s19
      %p16 = scmp.ge.s32.totalorder %s15, 4
      %s25 = sphi 0, %s27
      %s28 = sphi 0, %s25
      %s29 = sphi 0, %s28
      %s45 = sphi 0, %s29
      %s49 = sphi 0, %s49
      %s51 = sphi 0, %s49
      %s52 = sphi 0, %s51
      %s66 = sphi 0, %s52
      %s70 = sphi 0, %s70
      %s72 = sphi 0, %s70
      %s73 = sphi 0, %s72
      %s87 = sphi 0, %s73
      %s93 = sphi 0, %s95
      %s96 = sphi 0, %s93
      %s97 = sphi 0, %s96
      %s113 = sphi 0, %s97
    $region4: #{tpu_custom_call.1} parent=1 // loop_header_branch
      %18 = sbr.rel (%p16) target = $region8
    $region5: #{tpu_custom_call.1} parent=1 // loop_body
      %s20 = ssub.s32 %s15, 1
      %s21 = ssub.s32 %s15, 2
      %s22 = sadd.s32 %s15, 1
      %s23 = ssub.s32 %s15, %s22
      %p24 = scmp.eq.s32.totalorder %s23, 0
      %s26 = sadd.s32 %s25, 1
      %s27 = scalar_select %p24, %s25, %s26
      %p30 = pneg %p24
      %p31 = scmp.eq.s32.totalorder %s15, 1
      %p32 = por %p30, %p31
      %p33 = scmp.ne.s32.totalorder %s25, %s28
      %p34 = scmp.eq.s32.totalorder %s15, 0
      %p35 = por %p33, %p34
      %p36 = scmp.ne.s32.totalorder %s25, %s28
      %p37 = scmp.eq.s32.totalorder %s20, 1
      %p38 = por %p36, %p37
      %p39 = scmp.ne.s32.totalorder %s28, %s29
      %p40 = scmp.eq.s32.totalorder %s20, 0
      %p41 = por %p39, %p40
      %p42 = scmp.ne.s32.totalorder %s28, %s29
      %p43 = scmp.eq.s32.totalorder %s21, 1
      %p44 = por %p42, %p43
      %p46 = scmp.ne.s32.totalorder %s29, %s45
      %p47 = scmp.eq.s32.totalorder %s21, 0
      %p48 = por %p46, %p47
      %s50 = sadd.s32 %s49, 1
      %p53 = scmp.eq.s32.totalorder %s15, 1
      %p54 = scmp.ne.s32.totalorder %s49, %s51
      %p55 = scmp.eq.s32.totalorder %s15, 0
      %p56 = por %p54, %p55
      %p57 = scmp.ne.s32.totalorder %s49, %s51
      %p58 = scmp.eq.s32.totalorder %s20, 1
      %p59 = por %p57, %p58
      %p60 = scmp.ne.s32.totalorder %s51, %s52
      %p61 = scmp.eq.s32.totalorder %s20, 0
      %p62 = por %p60, %p61
      %p63 = scmp.ne.s32.totalorder %s51, %s52
      %p64 = scmp.eq.s32.totalorder %s21, 1
      %p65 = por %p63, %p64
      %p67 = scmp.ne.s32.totalorder %s52, %s66
      %p68 = scmp.eq.s32.totalorder %s21, 0
      %p69 = por %p67, %p68
      %s71 = sadd.s32 %s70, 1
      %p74 = scmp.eq.s32.totalorder %s15, 1
      %p75 = scmp.ne.s32.totalorder %s70, %s72
      %p76 = scmp.eq.s32.totalorder %s15, 0
      %p77 = por %p75, %p76
      %p78 = scmp.ne.s32.totalorder %s70, %s72
      %p79 = scmp.eq.s32.totalorder %s20, 1
      %p80 = por %p78, %p79
      %p81 = scmp.ne.s32.totalorder %s72, %s73
      %p82 = scmp.eq.s32.totalorder %s20, 0
      %p83 = por %p81, %p82
      %p84 = scmp.ne.s32.totalorder %s72, %s73
      %p85 = scmp.eq.s32.totalorder %s21, 1
      %p86 = por %p84, %p85
      %p88 = scmp.ne.s32.totalorder %s73, %s87
      %p89 = scmp.eq.s32.totalorder %s21, 0
      %p90 = por %p88, %p89
      %s91 = ssub.s32 %s15, %s22
      %p92 = scmp.eq.s32.totalorder %s91, 0
      %s94 = sadd.s32 %s93, 1
      %s95 = scalar_select %p92, %s93, %s94
      %p98 = pneg %p92
      %p99 = scmp.eq.s32.totalorder %s15, 1
      %p100 = por %p98, %p99
      %p101 = scmp.ne.s32.totalorder %s93, %s96
      %p102 = scmp.eq.s32.totalorder %s15, 0
      %p103 = por %p101, %p102
      %p104 = scmp.ne.s32.totalorder %s93, %s96
      %p105 = scmp.eq.s32.totalorder %s20, 1
      %p106 = por %p104, %p105
      %p107 = scmp.ne.s32.totalorder %s96, %s97
      %p108 = scmp.eq.s32.totalorder %s20, 0
      %p109 = por %p107, %p108
      %p110 = scmp.ne.s32.totalorder %s96, %s97
      %p111 = scmp.eq.s32.totalorder %s21, 1
      %p112 = por %p110, %p111
      %p114 = scmp.ne.s32.totalorder %s97, %s113
      %p115 = scmp.eq.s32.totalorder %s21, 0
      %p116 = por %p114, %p115
      %p117 = scmp.le.s32.totalorder 1, %s15
      %p118 = scmp.lt.s32.totalorder %s15, 3
      %p119 = pnand %p117, %p118
      %p120 = pneg %p119
      // Predicated region
      $region9: #{tpu_custom_call.1} parent=5 // pred_check
        _
      $region10: #{tpu_custom_call.1} parent=5 // pred_check_branch
        %122 = sbr.rel (%p119) target = $region12
      $region11: #{tpu_custom_call.1} parent=5 // pred_region
        %s123 = ssub.s32 %s15, 1
        // Predicated region
        $region13: #{tpu_custom_call.1} parent=11 // pred_check
          %p124 = pneg %p62
        $region14: #{tpu_custom_call.1} parent=11 // pred_check_branch
          %126 = sbr.rel (%p124) target = $region16
        $region15: #{tpu_custom_call.1} parent=11 // pred_region
          _
        $region16: #{tpu_custom_call.1} parent=11 // pred_fallthru
          _
        // Predicated region
        $region17: #{tpu_custom_call.1} parent=11 // pred_check
          %p127 = pneg %p83
        $region18: #{tpu_custom_call.1} parent=11 // pred_check_branch
          %129 = sbr.rel (%p127) target = $region20
        $region19: #{tpu_custom_call.1} parent=11 // pred_region
          _
        $region20: #{tpu_custom_call.1} parent=11 // pred_fallthru
          _
      $region12: #{tpu_custom_call.1} parent=5 // pred_fallthru
        _
      %p130 = scmp.lt.s32.totalorder %s15, 2
      // Predicated region
      $region21: #{tpu_custom_call.1} parent=5 // pred_check
        %p131 = pneg %p130
      $region22: #{tpu_custom_call.1} parent=5 // pred_check_branch
        %133 = sbr.rel (%p131) target = $region24
      $region23: #{tpu_custom_call.1} parent=5 // pred_region
        // Predicated region
        $region25: #{tpu_custom_call.1} parent=23 // pred_check
          %p134 = pneg %p35
        $region26: #{tpu_custom_call.1} parent=23 // pred_check_branch
          %136 = sbr.rel (%p134) target = $region28
        $region27: #{tpu_custom_call.1} parent=23 // pred_region
          %s137 = sand.u32 %s25, 1
          %s138 = scalar_lea.sflag [#allocation3], %s137
          %s139 = sand.u32 %s25, 1
          %s140 = smul.addr %s139, 32
          %s141 = scalar_lea.vmem [#allocation2], %s140
          %s143 = ssub.s32 512, 512
          %144 = vsyncadd %s138, %s143
          %s145 = smul.addr %s15, 4
          %s146 = smul.addr %s145, 128
          %s147 = scalar_lea.hbm %s0, %s146
          %s148 = sshll.u32 %s141, 4
          %s149 = int_to_ptr.vmem [resolvable:$true] %s148
          %154 = dma.hbm_to_vmem [thread:$0]  %s147, 512, %s149, %s138, 128, 128, 8
        $region28: #{tpu_custom_call.1} parent=23 // pred_fallthru
          _
      $region24: #{tpu_custom_call.1} parent=5 // pred_fallthru
        _
      %p155 = scmp.le.s32.totalorder 1, %s15
      %p156 = scmp.lt.s32.totalorder %s15, 3
      %p157 = pnand %p155, %p156
      %p158 = pneg %p157
      // Predicated region
      $region29: #{tpu_custom_call.1} parent=5 // pred_check
        _
      $region30: #{tpu_custom_call.1} parent=5 // pred_check_branch
        %160 = sbr.rel (%p157) target = $region32
      $region31: #{tpu_custom_call.1} parent=5 // pred_region
        %s161 = ssub.s32 %s15, 1
        %s162 = sand.u32 %s28, 1
        %s163 = scalar_lea.sflag [#allocation3], %s162
        %s164 = sand.u32 %s28, 1
        %s165 = smul.addr %s164, 32
        %s166 = scalar_lea.vmem [#allocation2], %s165
        // Predicated region
        $region33: #{tpu_custom_call.1} parent=31 // pred_check
          %p167 = pneg %p41
        $region34: #{tpu_custom_call.1} parent=31 // pred_check_branch
          %169 = sbr.rel (%p167) target = $region36
        $region35: #{tpu_custom_call.1} parent=31 // pred_region
          %170 = dma.done %s163, 512
        $region36: #{tpu_custom_call.1} parent=31 // pred_fallthru
          _
        %s171 = sand.u32 %s28, 1
        %s172 = scalar_lea.sflag [#allocation3], %s171
        %s173 = sand.u32 %s28, 1
        %s174 = smul.addr %s173, 32
        %s175 = scalar_lea.vmem [#allocation2], %s174
        %p176 = pneg %p41
        %p177 = pneg %p38
        %p178 = pneg %p62
        %p179 = pneg %p59
        %p180 = pneg %p83
        %p181 = pneg %p80
        %p182 = pneg %p109
        %p183 = pneg %p106
        %s184 = sand.u32 %s96, 1
        %s185 = scalar_lea.sflag [#allocation4], %s184
        %s186 = sand.u32 %s96, 1
        %s187 = smul.addr %s186, 32
        %s188 = scalar_lea.vmem [#allocation5], %s187
        %v189 = vld [vmem:[%s166] sm:$0xff]
        %v190 = vld [vmem:[%s166 + $0x8] sm:$0xff]
        %v191 = vld [vmem:[%s166 + $0x10] sm:$0xff]
        %v192 = vld [vmem:[%s166 + $0x18] sm:$0xff]
        %193 = vmax.xlane.f32.xlu0 %v189
        %v194 = vpop.xlane.xlu0 %193
        %195 = vmax.xlane.f32.xlu0 %v190
        %v196 = vpop.xlane.xlu0 %195
        %197 = vmax.xlane.f32.xlu0 %v191
        %v198 = vpop.xlane.xlu0 %197
        %199 = vmax.xlane.f32.xlu0 %v192
        %v200 = vpop.xlane.xlu0 %199
        %201 = vadd.xlane.f32.xlu0 %v189
        %v202 = vpop.xlane.xlu0 %201
        %203 = vadd.xlane.f32.xlu0 %v190
        %v204 = vpop.xlane.xlu0 %203
        %205 = vadd.xlane.f32.xlu0 %v191
        %v206 = vpop.xlane.xlu0 %205
        %207 = vadd.xlane.f32.xlu0 %v192
        %v208 = vpop.xlane.xlu0 %207
        %v209 = vadd.f32 %v202, 0.0
        %v210 = vadd.f32 %v204, 0.0
        %v211 = vadd.f32 %v206, 0.0
        %v212 = vadd.f32 %v208, 0.0
        %v213 = vmul.f32 %v209, 0.0078125
        %v214 = vmul.f32 %v210, 0.0078125
        %v215 = vmul.f32 %v211, 0.0078125
        %v216 = vmul.f32 %v212, 0.0078125
        %v217 = vld [vmem:[%s1] sm:$0xff]
        %v218 = vld [vmem:[%s1 + $0x8] sm:$0xff]
        %v219 = vld [vmem:[%s1 + $0x10] sm:$0xff]
        %v220 = vld [vmem:[%s1 + $0x18] sm:$0xff]
        %v221 = vld [vmem:[%s2] sm:$0x1]
        %v222 = vmul.f32 %v217, %v213
        %v223 = vmul.f32 %v218, %v214
        %v224 = vmul.f32 %v219, %v215
        %v225 = vmul.f32 %v220, %v216
        %vm226 = vcmask 15360
        %v227 = vsel %vm226, %v222, 0.0
        %v228 = vsel %vm226, %v223, 0.0
        %v229 = vadd.f32 %v227, %v228
        %v230 = vsel %vm226, %v224, 0.0
        %v231 = vadd.f32 %v229, %v230
        %v232 = vsel %vm226, %v225, 0.0
        %v233 = vadd.f32 %v231, %v232
        %v234 = vrot.slane %v233, 4
        %v235 = vadd.f32 %v233, %v234
        %v236 = vrot.slane %v235, 2
        %v237 = vadd.f32 %v235, %v236
        %v238 = vrot.slane %v237, 1
        %v239 = vadd.f32 %v237, %v238
        %v240 = vadd.f32 %v239, %v221
        %v241 = vmax.f32 %v240, 0.0
        %v242 = vlaneseq
        %v243 = vshrl.u32 %v242, 7
        %v244 = vsub.s32 0, %v243
        %v245 = vrot.slane %v241, %v244
        %247 = vrot.lane.b32.xlu0 %v245, 2
        %v248 = vpop.permute.xlu0 %247
        %v250 = vmul.f32 %v217, %v248
        %v251 = vmul.f32 %v218, %v248
        %v252 = vmul.f32 %v219, %v248
        %v253 = vmul.f32 %v220, %v248
        %258 = vrot.lane.b32.xlu0 %v250, 126
        %v259 = vpop.permute.xlu0 %258
        %260 = vrot.lane.b32.xlu0 %v251, 126
        %v261 = vpop.permute.xlu0 %260
        %262 = vrot.lane.b32.xlu0 %v252, 126
        %v263 = vpop.permute.xlu0 %262
        %264 = vrot.lane.b32.xlu0 %v253, 126
        %v265 = vpop.permute.xlu0 %264
        %v270 = vsel %vm226, %v259, 0.0
        %271 = vadd.xlane.f32.xlu0 %v270
        %v272 = vpop.xlane.xlu0 %271
        %v273 = vsel %vm226, %v261, 0.0
        %274 = vadd.xlane.f32.xlu0 %v273
        %v275 = vpop.xlane.xlu0 %274
        %v276 = vsel %vm226, %v263, 0.0
        %277 = vadd.xlane.f32.xlu0 %v276
        %v278 = vpop.xlane.xlu0 %277
        %v279 = vsel %vm226, %v265, 0.0
        %280 = vadd.xlane.f32.xlu0 %v279
        %v281 = vpop.xlane.xlu0 %280
        %v282 = vadd.f32 %v272, %v217
        %v283 = vadd.f32 %v275, %v218
        %v284 = vadd.f32 %v278, %v219
        %v285 = vadd.f32 %v281, %v220
        %v286 = vmul.f32 %v217, %v194
        %v287 = vmul.f32 %v218, %v196
        %v288 = vmul.f32 %v219, %v198
        %v289 = vmul.f32 %v220, %v200
        %vm290 = vcmask 48160
        %v291 = vsel %vm290, %v286, 0.0
        %v292 = vsel %vm290, %v287, 0.0
        %v293 = vadd.f32 %v291, %v292
        %v294 = vsel %vm290, %v288, 0.0
        %v295 = vadd.f32 %v293, %v294
        %v296 = vsel %vm290, %v289, 0.0
        %v297 = vadd.f32 %v295, %v296
        %v298 = vrot.slane %v297, 4
        %v299 = vadd.f32 %v297, %v298
        %v300 = vrot.slane %v299, 2
        %v301 = vadd.f32 %v299, %v300
        %v302 = vrot.slane %v301, 1
        %v303 = vadd.f32 %v301, %v302
        %v305 = vlaneseq
        %v306 = vshrl.u32 %v305, 7
        %v307 = vsub.s32 0, %v306
        %v308 = vrot.slane %v221, %v307
        %309 = vrot.lane.b32.xlu0 %v308, 2
        %v310 = vpop.permute.xlu0 %309
        %v312 = vadd.f32 %v303, %v310
        %v313 = vmax.f32 %v312, 0.0
        %v314 = vlaneseq
        %v315 = vshrl.u32 %v314, 7
        %v316 = vsub.s32 0, %v315
        %v317 = vrot.slane %v313, %v316
        %319 = vrot.lane.b32.xlu0 %v317, 2
        %v320 = vpop.permute.xlu0 %319
        %v322 = vmul.f32 %v217, %v320
        %v323 = vmul.f32 %v218, %v320
        %v324 = vmul.f32 %v219, %v320
        %v325 = vmul.f32 %v220, %v320
        %330 = vrot.lane.b32.xlu0 %v322, 122
        %v331 = vpop.permute.xlu0 %330
        %332 = vrot.lane.b32.xlu0 %v323, 122
        %v333 = vpop.permute.xlu0 %332
        %334 = vrot.lane.b32.xlu0 %v324, 122
        %v335 = vpop.permute.xlu0 %334
        %336 = vrot.lane.b32.xlu0 %v325, 122
        %v337 = vpop.permute.xlu0 %336
        %v342 = vsel %vm226, %v331, 0.0
        %343 = vadd.xlane.f32.xlu0 %v342
        %v344 = vpop.xlane.xlu0 %343
        %v345 = vsel %vm226, %v333, 0.0
        %346 = vadd.xlane.f32.xlu0 %v345
        %v347 = vpop.xlane.xlu0 %346
        %v348 = vsel %vm226, %v335, 0.0
        %349 = vadd.xlane.f32.xlu0 %v348
        %v350 = vpop.xlane.xlu0 %349
        %v351 = vsel %vm226, %v337, 0.0
        %352 = vadd.xlane.f32.xlu0 %v351
        %v353 = vpop.xlane.xlu0 %352
        %v354 = vadd.f32 %v344, %v217
        %v355 = vadd.f32 %v347, %v218
        %v356 = vadd.f32 %v350, %v219
        %v357 = vadd.f32 %v353, %v220
        %362 = vrot.lane.b32.xlu0 %v354, 127
        %v363 = vpop.permute.xlu0 %362
        %364 = vrot.lane.b32.xlu0 %v355, 127
        %v365 = vpop.permute.xlu0 %364
        %366 = vrot.lane.b32.xlu0 %v356, 127
        %v367 = vpop.permute.xlu0 %366
        %368 = vrot.lane.b32.xlu0 %v357, 127
        %v369 = vpop.permute.xlu0 %368
        %v374 = vadd.f32 %v282, %v363
        %v375 = vadd.f32 %v283, %v365
        %v376 = vadd.f32 %v284, %v367
        %v377 = vadd.f32 %v285, %v369
        %v378 = vxor.u32 %v374, 2147483648
        %v379 = vxor.u32 %v375, 2147483648
        %v380 = vxor.u32 %v376, 2147483648
        %v381 = vxor.u32 %v377, 2147483648
        %v382 = vmul.f32 %v378, 1.442695
        %v383 = vpow.pop %v382
        %v384 = vmul.f32 %v379, 1.442695
        %v385 = vpow.pop %v384
        %v386 = vmul.f32 %v380, 1.442695
        %v387 = vpow.pop %v386
        %v388 = vmul.f32 %v381, 1.442695
        %v389 = vpow.pop %v388
        %v390 = vadd.f32 %v383, 1.0
        %v391 = vadd.f32 %v385, 1.0
        %v392 = vadd.f32 %v387, 1.0
        %v393 = vadd.f32 %v389, 1.0
        %v394 = vrcp.pop %v390
        %v395 = vmul.f32 1.0, %v394
        %v396 = vrcp.pop %v391
        %v397 = vmul.f32 1.0, %v396
        %v398 = vrcp.pop %v392
        %v399 = vmul.f32 1.0, %v398
        %v400 = vrcp.pop %v393
        %v401 = vmul.f32 1.0, %v400
        %v402 = vmul.f32 %v395, %v194
        %v403 = vmul.f32 %v397, %v196
        %v404 = vmul.f32 %v399, %v198
        %v405 = vmul.f32 %v401, %v200
        %410 = vrot.lane.b32.xlu0 %v402, 2
        %v411 = vpop.permute.xlu0 %410
        %412 = vrot.lane.b32.xlu0 %v403, 2
        %v413 = vpop.permute.xlu0 %412
        %414 = vrot.lane.b32.xlu0 %v404, 2
        %v415 = vpop.permute.xlu0 %414
        %416 = vrot.lane.b32.xlu0 %v405, 2
        %v417 = vpop.permute.xlu0 %416
        %v422 = vmul.f32 %v217, %v411
        %v423 = vmul.f32 %v218, %v413
        %v424 = vmul.f32 %v219, %v415
        %v425 = vmul.f32 %v220, %v417
        %v426 = vmul.f32 %v395, %v213
        %v427 = vmul.f32 %v397, %v214
        %v428 = vmul.f32 %v399, %v215
        %v429 = vmul.f32 %v401, %v216
        %434 = vrot.lane.b32.xlu0 %v426, 3
        %v435 = vpop.permute.xlu0 %434
        %436 = vrot.lane.b32.xlu0 %v427, 3
        %v437 = vpop.permute.xlu0 %436
        %438 = vrot.lane.b32.xlu0 %v428, 3
        %v439 = vpop.permute.xlu0 %438
        %440 = vrot.lane.b32.xlu0 %v429, 3
        %v441 = vpop.permute.xlu0 %440
        %v446 = vmul.f32 %v217, %v435
        %v447 = vmul.f32 %v218, %v437
        %v448 = vmul.f32 %v219, %v439
        %v449 = vmul.f32 %v220, %v441
        %454 = vrot.lane.b32.xlu0 %v446, 127
        %v455 = vpop.permute.xlu0 %454
        %456 = vrot.lane.b32.xlu0 %v447, 127
        %v457 = vpop.permute.xlu0 %456
        %458 = vrot.lane.b32.xlu0 %v448, 127
        %v459 = vpop.permute.xlu0 %458
        %460 = vrot.lane.b32.xlu0 %v449, 127
        %v461 = vpop.permute.xlu0 %460
        %v466 = vadd.f32 %v422, %v455
        %v467 = vadd.f32 %v423, %v457
        %v468 = vadd.f32 %v424, %v459
        %v469 = vadd.f32 %v425, %v461
        %474 = vrot.lane.b32.xlu0 %v466, 118
        %v475 = vpop.permute.xlu0 %474
        %476 = vrot.lane.b32.xlu0 %v467, 118
        %v477 = vpop.permute.xlu0 %476
        %478 = vrot.lane.b32.xlu0 %v468, 118
        %v479 = vpop.permute.xlu0 %478
        %480 = vrot.lane.b32.xlu0 %v469, 118
        %v481 = vpop.permute.xlu0 %480
        %vm486 = vcmask 7168
        %v487 = vsel %vm486, %v475, 0.0
        %v488 = vsel %vm486, %v477, 0.0
        %v489 = vadd.f32 %v487, %v488
        %v490 = vsel %vm486, %v479, 0.0
        %v491 = vadd.f32 %v489, %v490
        %v492 = vsel %vm486, %v481, 0.0
        %v493 = vadd.f32 %v491, %v492
        %494 = vadd.xlane.f32.xlu0 %v493
        %v495 = vpop.xlane.xlu0 %494
        %v496 = vrot.slane %v495, 4
        %v497 = vadd.f32 %v495, %v496
        %v498 = vrot.slane %v497, 2
        %v499 = vadd.f32 %v497, %v498
        %v500 = vrot.slane %v499, 1
        %v501 = vadd.f32 %v499, %v500
        %s502 = vtos %v501
        %v503 = vstv %s502
        %v504 = vadd.f32 %v503, %v221
        %v505 = vxor.u32 %v504, 2147483648
        %v506 = vmul.f32 %v505, 1.442695
        %v507 = vpow.pop %v506
        %v508 = vadd.f32 %v507, 1.0
        %v509 = vrcp.pop %v508
        %v510 = vmul.f32 1.0, %v509
        %v512 = vlaneseq
        %v513 = vshrl.u32 %v512, 7
        %v514 = vsub.s32 0, %v513
        %v515 = vrot.slane %v510, %v514
        %521 = vrot.lane.b32.xlu0 %v395, 124
        %v522 = vpop.permute.xlu0 %521
        %523 = vrot.lane.b32.xlu0 %v397, 124
        %v524 = vpop.permute.xlu0 %523
        %525 = vrot.lane.b32.xlu0 %v399, 124
        %v526 = vpop.permute.xlu0 %525
        %527 = vrot.lane.b32.xlu0 %v401, 124
        %v528 = vpop.permute.xlu0 %527
        %v533 = vmul.f32 %v515, %v522
        %v534 = vmul.f32 %v515, %v524
        %v535 = vmul.f32 %v515, %v526
        %v536 = vmul.f32 %v515, %v528
        %538 = vset.pattern.permute.xlu0 4
        %539 = vperm.xlu0 %538, %v533
        %v540 = vpop.permute.xlu0 %539
        %543 = vset.pattern.permute.xlu0 4
        %544 = vperm.xlu0 %543, %v534
        %v545 = vpop.permute.xlu0 %544
        %548 = vset.pattern.permute.xlu0 4
        %549 = vperm.xlu0 %548, %v535
        %v550 = vpop.permute.xlu0 %549
        %553 = vset.pattern.permute.xlu0 4
        %554 = vperm.xlu0 %553, %v536
        %v555 = vpop.permute.xlu0 %554
        %v557 = vmul.f32 %v189, %v540
        %v558 = vmul.f32 %v190, %v545
        %v559 = vmul.f32 %v191, %v550
        %v560 = vmul.f32 %v192, %v555
        %561 = vst [vmem:[%s188] sm:$0xff] %v557
        %562 = vst [vmem:[%s188 + $0x8] sm:$0xff] %v558
        %563 = vst [vmem:[%s188 + $0x10] sm:$0xff] %v559
        %564 = vst [vmem:[%s188 + $0x18] sm:$0xff] %v560
        %s565 = sand.u32 %s96, 1
        %s566 = scalar_lea.sflag [#allocation4], %s565
        %s567 = sand.u32 %s96, 1
        %s568 = smul.addr %s567, 32
        %s569 = scalar_lea.vmem [#allocation5], %s568
        // Predicated region
        $region37: #{tpu_custom_call.1} parent=31 // pred_check
          %p570 = pneg %p106
        $region38: #{tpu_custom_call.1} parent=31 // pred_check_branch
          %572 = sbr.rel (%p570) target = $region40
        $region39: #{tpu_custom_call.1} parent=31 // pred_region
          %s574 = ssub.s32 512, 512
          %575 = vsyncadd %s566, %s574
          %s576 = smul.addr %s20, 4
          %s577 = smul.addr %s576, 128
          %s578 = scalar_lea.hbm %s3, %s577
          %s579 = sshll.u32 %s569, 4
          %s580 = int_to_ptr.vmem [resolvable:$true] %s579
          %585 = dma.vmem_to_hbm [thread:$0]  %s580, 512, %s578, %s566, 128, 128, 8
        $region40: #{tpu_custom_call.1} parent=31 // pred_fallthru
          _
      $region32: #{tpu_custom_call.1} parent=5 // pred_fallthru
        _
      %p586 = scmp.le.s32.totalorder 2, %s15
      // Predicated region
      $region41: #{tpu_custom_call.1} parent=5 // pred_check
        %p587 = pneg %p586
      $region42: #{tpu_custom_call.1} parent=5 // pred_check_branch
        %589 = sbr.rel (%p587) target = $region44
      $region43: #{tpu_custom_call.1} parent=5 // pred_region
        %s590 = ssub.s32 %s15, 2
        // Predicated region
        $region45: #{tpu_custom_call.1} parent=43 // pred_check
          %p591 = pneg %p112
        $region46: #{tpu_custom_call.1} parent=43 // pred_check_branch
          %593 = sbr.rel (%p591) target = $region48
        $region47: #{tpu_custom_call.1} parent=43 // pred_region
          %s594 = sand.u32 %s97, 1
          %s595 = scalar_lea.sflag [#allocation4], %s594
          %s596 = sand.u32 %s97, 1
          %s597 = smul.addr %s596, 32
          %s598 = scalar_lea.vmem [#allocation5], %s597
          %599 = dma.done %s595, 512
        $region48: #{tpu_custom_call.1} parent=43 // pred_fallthru
          _
      $region44: #{tpu_custom_call.1} parent=5 // pred_fallthru
        _
    $region6: #{tpu_custom_call.1} parent=1 // loop_footer
      %s19 = sadd.s32 1, %s15
    $region7: #{tpu_custom_call.1} parent=1 // loop_footer_branch
      %14 = sbr.rel target = $region3
    $region8: #{tpu_custom_call.1} parent=1 // loop_exit
      _
    %600 = vsyncpa [#allocation3], 1
    %s601 = scalar_lea.sflag [#allocation3], 1
    %602 = vsyncpa %s601, 1
    %603 = vsyncpa [#allocation4], 1
    %s604 = scalar_lea.sflag [#allocation4], 1
    %605 = vsyncpa %s604, 1

</llo_original>
